<compile_context>
chip_gen: v6e
topology: v6e:2x2x1
jax: 0.10.0
libtpu: 0.0.40
codegen_flags: <defaults>
</compile_context>

<pallas_src>
import jax
import jax.numpy as jnp
from jax.experimental import pallas as pl
from jax.experimental.pallas import tpu as pltpu

_VMEM_WORKING_BUDGET = 24 * 1024 * 1024   # conservative across v5e/v6e/v7x
_VMEM_LIMIT_BYTES = 32 * 1024 * 1024      # >= every chip's scoped default need


def _round_up(x, m):
    return ((x + m - 1) // m) * m


def _critic_kernel(x_ref, w_ref, b_ref, o_ref):
    # x_ref: (TM, in)  w_ref: (out, in)  b_ref: (1, out)  o_ref: (TM, out)
    # NT contraction (both operands contract their lane axis): x @ W.T on the
    # MXU with f32 accumulation, broadcast bias add as the epilogue.
    acc = jax.lax.dot_general(
        x_ref[...],
        w_ref[...],
        dimension_numbers=(((1,), (1,)), ((), ())),
        preferred_element_type=jnp.float32,
    )
    o_ref[...] = (acc + b_ref[...]).astype(o_ref.dtype)


def _choose_batch_tile(B, in_size, out_size, tm):
    """Pick (tm_eff, grid_m): VMEM-safe, minimal pad waste, >=2 steps on v7x."""
    bpe = 4  # f32 bytes
    # Resident operands; budget the constant-index weight at 2x (worst-case
    # double buffering), bias is negligible.
    resident = bpe * (2 * out_size * in_size + out_size)
    # Per-row cost of the pipelined tiles (x and out double-buffered).
    per_row = bpe * (2 * in_size + 2 * out_size)
    tm_cap = max(8, ((_VMEM_WORKING_BUDGET - resident) // max(per_row, 1)) // 8 * 8)

    tm_target = max(8, min(tm, tm_cap, _round_up(B, 8)))
    grid_m = pl.cdiv(B, tm_target)
    if grid_m < 2 and B >= 16:
        # v7x has 2 TensorCores per chip; give the "parallel" batch axis at
        # least 2 grid steps (neutral on single-core v5e/v6e).
        grid_m = 2
    # Minimal padding: last tile pads at most 7 rows.
    tm_eff = min(_round_up(pl.cdiv(B, grid_m), 8), max(8, tm_cap))
    grid_m = pl.cdiv(B, tm_eff)
    return tm_eff, grid_m


def critic_forward(x, weight, bias, *, tm=512):
    """Critic.forward: x @ weight.T + bias.

    x: [B, in]   weight: [out, in] (PyTorch convention)   bias: [out]
    Returns: [B, out] in x.dtype (f32 accumulation on the MXU).
    """
    B, in_size = x.shape
    out_size, in_w = weight.shape
    assert in_w == in_size, "weight must be [out, in]"
    assert bias.shape == (out_size,)

    tm_eff, grid_m = _choose_batch_tile(B, in_size, out_size, tm)
    b_padded = grid_m * tm_eff
    if b_padded != B:
        x = jnp.pad(x, ((0, b_padded - B), (0, 0)))  # <= 7 dead rows

    # Bias as a (1, out) row so the in-kernel broadcast add is 2-D.
    b2d = bias.reshape(1, out_size)

    out = pl.pallas_call(
        _critic_kernel,
        out_shape=jax.ShapeDtypeStruct((b_padded, out_size), x.dtype),
        grid_spec=pltpu.PrefetchScalarGridSpec(
            num_scalar_prefetch=0,
            grid=(grid_m,),
            in_specs=[
                # Streamed x tile (pipeline double-buffers it across steps).
                pl.BlockSpec((tm_eff, in_size), lambda i: (i, 0)),
                # Weight / bias: constant block index -> copied in once and
                # kept resident for every grid step.
                pl.BlockSpec((out_size, in_size), lambda i: (0, 0)),
                pl.BlockSpec((1, out_size), lambda i: (0, 0)),
            ],
            # Output block uses the natural out_size lane width (== full array
            # dim): no 128-lane padding, no inflated writeback, no post-slice.
            out_specs=pl.BlockSpec((tm_eff, out_size), lambda i: (i, 0)),
        ),
        compiler_params=pltpu.CompilerParams(
            dimension_semantics=("parallel",),
            vmem_limit_bytes=_VMEM_LIMIT_BYTES,
        ),
    )(x, weight, b2d)

    if b_padded != B:
        out = out[:B]
    return out


if __name__ == "__main__":
    # Small shapes consistent with the module: batch=8, input_size=32, output_size=16
    batch, input_size, output_size = 8, 32, 16

    key = jax.random.PRNGKey(0)
    kx, kx2, kw, kb = jax.random.split(key, 4)

    # Deterministic PyTorch-Linear-style init: uniform(-1/sqrt(in), 1/sqrt(in))
    bound = 1.0 / (input_size ** 0.5)
    weight = jax.random.uniform(kw, (output_size, input_size),
                                minval=-bound, maxval=bound, dtype=jnp.float32)
    bias = jax.random.uniform(kb, (output_size,),
                              minval=-bound, maxval=bound, dtype=jnp.float32)
    x = jax.random.normal(kx, (batch, input_size), dtype=jnp.float32)

    # jit so any (rare) batch pad / final slice fuses into one XLA program
    # instead of separate per-call HBM copy kernels.
    fwd = jax.jit(critic_forward)

    out = jax.block_until_ready(fwd(x, weight, bias))
    ref = x @ weight.T + bias
    assert out.shape == (batch, output_size)
    assert jnp.allclose(out, ref, atol=1e-5, rtol=1e-5)

    # Also exercise the padded-batch / multi-step-grid (v7x two-core) path.
    x2 = jax.random.normal(kx2, (20, input_size), dtype=jnp.float32)
    out2 = jax.block_until_ready(fwd(x2, weight, bias))
    ref2 = x2 @ weight.T + bias
    assert out2.shape == (20, output_size)
    assert jnp.allclose(out2, ref2, atol=1e-5, rtol=1e-5)

    print("KERNEL_OK")
</pallas_src>

<mosaic_0001>
module attributes {stable_mosaic.version = 11 : i64} {
  func.func @_critic_kernel(%arg0: i32, %arg1: memref<8x32xf32, #tpu.memory_space<vmem>>, %arg2: memref<16x32xf32, #tpu.memory_space<vmem>>, %arg3: memref<1x16xf32, #tpu.memory_space<vmem>>, %arg4: memref<8x16xf32, #tpu.memory_space<vmem>>) attributes {dimension_semantics = [#tpu.dimension_semantics<parallel>], iteration_bounds = array<i64: 1>, scalar_prefetch = 0 : i64, scratch_operands = 0 : i64, tpu.core_type = #tpu.core_type<tc>, window_params = [{transform_indices = @transform_0, window_bounds = array<i64: 8, 32>}, {pipeline_mode = #tpu.pipeline_mode<synchronous>, transform_indices = @transform_1, window_bounds = array<i64: 16, 32>}, {pipeline_mode = #tpu.pipeline_mode<synchronous>, transform_indices = @transform_2, window_bounds = array<i64: 1, 16>}, {transform_indices = @transform_3, window_bounds = array<i64: 8, 16>}]} {
    %c0 = arith.constant 0 : index
    %c0_0 = arith.constant 0 : index
    %0 = vector.load %arg1[%c0, %c0_0] : memref<8x32xf32, #tpu.memory_space<vmem>>, vector<8x32xf32>
    %c0_1 = arith.constant 0 : index
    %c0_2 = arith.constant 0 : index
    %1 = vector.load %arg2[%c0_1, %c0_2] : memref<16x32xf32, #tpu.memory_space<vmem>>, vector<16x32xf32>
    %cst = arith.constant dense<0.000000e+00> : vector<8x16xf32>
    %2 = tpu.matmul %0, %1, %cst {dimension_numbers = #tpu.dot_dimension_numbers<[1], [1], [0], [0], [0, 0, 1, 0], [], []>} : vector<8x32xf32>, vector<16x32xf32>, vector<8x16xf32> -> vector<8x16xf32>
    %c0_3 = arith.constant 0 : index
    %c0_4 = arith.constant 0 : index
    %3 = vector.load %arg3[%c0_3, %c0_4] : memref<1x16xf32, #tpu.memory_space<vmem>>, vector<1x16xf32>
    %4 = vector.broadcast %3 : vector<1x16xf32> to vector<8x16xf32>
    %5 = arith.addf %2, %4 : vector<8x16xf32>
    %c0_5 = arith.constant 0 : index
    %c0_6 = arith.constant 0 : index
    %6 = vector.load %arg4[%c0_5, %c0_6] : memref<8x16xf32, #tpu.memory_space<vmem>>, vector<8x16xf32>
    tpu.vector_store %arg4[%c0_5, %c0_6], %5 {strides = array<i32>} : memref<8x16xf32, #tpu.memory_space<vmem>>, vector<8x16xf32>,
    return
  }
  func.func @transform_0(%arg0: i32) -> (i32, i32) {
    %c0_i32 = arith.constant 0 : i32
    %c0_i32_0 = arith.constant 0 : i32
    return %arg0, %c0_i32 : i32, i32
  }
  func.func @transform_1(%arg0: i32) -> (i32, i32) {
    %c0_i32 = arith.constant 0 : i32
    %c0_i32_0 = arith.constant 0 : i32
    %c0_i32_1 = arith.constant 0 : i32
    return %c0_i32, %c0_i32_0 : i32, i32
  }
  func.func @transform_2(%arg0: i32) -> (i32, i32) {
    %c0_i32 = arith.constant 0 : i32
    %c0_i32_0 = arith.constant 0 : i32
    %c0_i32_1 = arith.constant 0 : i32
    return %c0_i32, %c0_i32_0 : i32, i32
  }
  func.func @transform_3(%arg0: i32) -> (i32, i32) {
    %c0_i32 = arith.constant 0 : i32
    %c0_i32_0 = arith.constant 0 : i32
    return %arg0, %c0_i32 : i32, i32
  }
}

</mosaic_0001>

<llo_original>
// kernel: critic_forward.1
$region0: #{critic_forward.1}
  #allocation0 [shape = 'u32[]', space=smem, size = 0x4, offset = 0x4, fixed_abs, tag = 'smem constant byte address 0x4 - core index']
  #allocation1 [shape = 'u32[144,128]{1,0:T(1,128)}', space=vmem, size = 0x12000, scoped, tag = 'internal scratch']
  %s0 = inlined_call_operand.hbm [shape: f32[8,32], index: 0, kind: input, shape index: {}]
  %s1 = inlined_call_operand.hbm [shape: f32[16,32], index: 1, kind: input, shape index: {}]
  %s2 = inlined_call_operand.vmem [shape: f32[1,16], index: 2, kind: input, shape index: {}]
  %s3 = inlined_call_operand.hbm [shape: f32[8,16], index: 3, kind: output, shape index: {}]
  %s4 = sld [smem:[#allocation0]]
  $region30: #{critic_forward.1} parent=0
    _
  %s6 = ssub.s32 1, %s4
  %s7 = scalar_select 0, %s6, %s4
  $region1: #{critic_forward.1} parent=0
    #allocation2 [shape = 'u8[4096]{0}', space=vmem, size = 0x1000, scoped, tag = 'input window, operand 0, single buffered']
    #allocation3 [shape = 's32[1]{0}', space=sflag, size = 0x4, scoped, tag = 'scoped memory for critic_forward.1']
    #allocation4 [shape = 's32[1]{0}', space=sflag, size = 0x4, scoped, tag = 'scoped memory for critic_forward.1']
    #allocation5 [shape = 'u8[8192]{0}', space=vmem, size = 0x2000, scoped, tag = 'input window, operand 1, single buffered']
    #allocation6 [shape = 's32[1]{0}', space=sflag, size = 0x4, scoped, tag = 'scoped memory for critic_forward.1']
    #allocation7 [shape = 'u8[4096]{0}', space=vmem, size = 0x1000, scoped, tag = 'output window, operand 0, single buffered']
    %8 = vsyncpa [#allocation3], 0
    %9 = vsyncpa [#allocation6], 0
    %10 = vsyncpa [#allocation4], 0
    // Predicated region
    $region2: #{critic_forward.1} parent=1 // pred_check
      _
    $region3: #{critic_forward.1} parent=1 // pred_check_branch
      %12 = sbr.rel (0) target = $region5
    $region4: #{critic_forward.1} parent=1 // pred_region
      %s14 = ssub.s32 128, 128
      %15 = vsyncadd [#allocation3], %s14
      %s17 = sshll.u32 [#allocation2], 4
      %s18 = int_to_ptr.vmem [resolvable:$true] %s17
      %20 = dma.hbm_to_vmem [thread:$0]  %s0, 128, %s18, [#allocation3]
    $region5: #{critic_forward.1} parent=1 // pred_fallthru
      _
    // Predicated region
    $region6: #{critic_forward.1} parent=1 // pred_check
      _
    $region7: #{critic_forward.1} parent=1 // pred_check_branch
      %22 = sbr.rel (0) target = $region9
    $region8: #{critic_forward.1} parent=1 // pred_region
      %s24 = ssub.s32 256, 256
      %25 = vsyncadd [#allocation6], %s24
      %s26 = sshll.u32 [#allocation5], 4
      %s27 = int_to_ptr.vmem [resolvable:$true] %s26
      %32 = dma.hbm_to_vmem [thread:$0]  %s1, 256, %s27, [#allocation6], 128, 128, 8
    $region9: #{critic_forward.1} parent=1 // pred_fallthru
      _
    // Predicated region
    $region10: #{critic_forward.1} parent=1 // pred_check
      _
    $region11: #{critic_forward.1} parent=1 // pred_check_branch
      %34 = sbr.rel (0) target = $region13
    $region12: #{critic_forward.1} parent=1 // pred_region
      _
    $region13: #{critic_forward.1} parent=1 // pred_fallthru
      _
    // Predicated region
    $region14: #{critic_forward.1} parent=1 // pred_check
      _
    $region15: #{critic_forward.1} parent=1 // pred_check_branch
      %36 = sbr.rel (0) target = $region17
    $region16: #{critic_forward.1} parent=1 // pred_region
      %37 = dma.done [#allocation3], 128
    $region17: #{critic_forward.1} parent=1 // pred_fallthru
      _
    // Predicated region
    $region18: #{critic_forward.1} parent=1 // pred_check
      _
    $region19: #{critic_forward.1} parent=1 // pred_check_branch
      %39 = sbr.rel (0) target = $region21
    $region20: #{critic_forward.1} parent=1 // pred_region
      %40 = dma.done [#allocation6], 256
    $region21: #{critic_forward.1} parent=1 // pred_fallthru
      _
    %v41 = vld [vmem:[#allocation2] sm:$0xff]
    %v42 = vld [vmem:[#allocation5] sm:$0xff]
    %v43 = vld [vmem:[#allocation5 + $0x8] sm:$0xff]
    %v44 = vld [vmem:[%s2] sm:$0x1]
    %v46 = vlaneseq
    %v47 = vshrl.u32 %v46, 7
    %v48 = vsub.s32 0, %v47
    %v49 = vrot.slane %v44, %v48
    %vm51 = vcmask 261120
    %v53 = vsel %vm51, %v41, 0
    %v56 = vsel %vm51, %v42, 0
    %v59 = vsel %vm51, %v43, 0
    %61 = vmatprep.subr.mxu0 0.0
    %62 = vmatpush1.xpose.msra.mxu0 0.0
    %63 = vmatprep.subr.mxu0 0.0
    %64 = vmatpush1.xpose.msra.mxu0 0.0
    %65 = vmatprep.subr.mxu0 0.0
    %66 = vmatpush1.xpose.msra.mxu0 0.0
    %67 = vmatprep.subr.mxu0 0.0
    %68 = vmatpush1.xpose.msra.mxu0 0.0
    %69 = vmatprep.subr.mxu0 0.0
    %70 = vmatpush1.xpose.msra.mxu0 0.0
    %71 = vmatprep.subr.mxu0 0.0
    %72 = vmatpush1.xpose.msra.mxu0 0.0
    %73 = vmatprep.subr.mxu0 0.0
    %74 = vmatpush1.xpose.msra.mxu0 0.0
    %75 = vmatprep.subr.mxu0 0.0
    %76 = vmatpush1.xpose.msra.mxu0 0.0
    %77 = vmatprep.subr.mxu0 0.0
    %78 = vmatpush1.xpose.msra.mxu0 0.0
    %79 = vmatprep.subr.mxu0 0.0
    %80 = vmatpush1.xpose.msra.mxu0 0.0
    %81 = vmatprep.subr.mxu0 0.0
    %82 = vmatpush1.xpose.msra.mxu0 0.0
    %83 = vmatprep.subr.mxu0 0.0
    %84 = vmatpush1.xpose.msra.mxu0 0.0
    %85 = vmatprep.subr.mxu0 0.0
    %86 = vmatpush1.xpose.msra.mxu0 0.0
    %87 = vmatprep.subr.mxu0 0.0
    %88 = vmatpush1.xpose.msra.mxu0 0.0
    %89 = vmatprep.subr.mxu0 0.0
    %90 = vmatpush1.xpose.msra.mxu0 %v59
    %91 = vmatprep.subr.mxu0 0.0
    %92 = vmatpush1.xpose.msra.mxu0 %v56
    %93 = vmatprep.subr.mxu0 0.0
    %94 = vmatpush2.xpose.msra.mxu0 0.0
    %95 = vmatprep.subr.mxu0 0.0
    %96 = vmatpush2.xpose.msra.mxu0 0.0
    %97 = vmatprep.subr.mxu0 0.0
    %98 = vmatpush2.xpose.msra.mxu0 0.0
    %99 = vmatprep.subr.mxu0 0.0
    %100 = vmatpush2.xpose.msra.mxu0 0.0
    %101 = vmatprep.subr.mxu0 0.0
    %102 = vmatpush2.xpose.msra.mxu0 0.0
    %103 = vmatprep.subr.mxu0 0.0
    %104 = vmatpush2.xpose.msra.mxu0 0.0
    %105 = vmatprep.subr.mxu0 0.0
    %106 = vmatpush2.xpose.msra.mxu0 0.0
    %107 = vmatprep.subr.mxu0 0.0
    %108 = vmatpush2.xpose.msra.mxu0 0.0
    %109 = vmatprep.subr.mxu0 0.0
    %110 = vmatpush2.xpose.msra.mxu0 0.0
    %111 = vmatprep.subr.mxu0 0.0
    %112 = vmatpush2.xpose.msra.mxu0 0.0
    %113 = vmatprep.subr.mxu0 0.0
    %114 = vmatpush2.xpose.msra.mxu0 0.0
    %115 = vmatprep.subr.mxu0 0.0
    %116 = vmatpush2.xpose.msra.mxu0 0.0
    %117 = vmatprep.subr.mxu0 0.0
    %118 = vmatpush2.xpose.msra.mxu0 0.0
    %119 = vmatprep.subr.mxu0 0.0
    %120 = vmatpush2.xpose.msra.mxu0 0.0
    %121 = vmatprep.subr.mxu0 0.0
    %122 = vmatpush2.xpose.msra.mxu0 0.0
    %123 = vmatprep.subr.mxu0 0.0
    %124 = vmatpush2.xpose.msra.mxu0 0.0
    %125 = vmatprep.mubr.f32.mxu0 0.0
    %126 = vmatmul.mubr.f32.gmra.mxu0 %v53
    %v127 = vpop.f32.mrf.mxu0
    %v128 = vadd.f32 %v49, %v127
    %v129 = vpop.f32.mrf.mxu0
    %130 = vdwg.mxu0
    %vm131 = vcmask 130048
    %132 = vst.msk [vmem:[#allocation7] sm:$0xff] %vm131, %v128
    // Predicated region
    $region22: #{critic_forward.1} parent=1 // pred_check
      _
    $region23: #{critic_forward.1} parent=1 // pred_check_branch
      %134 = sbr.rel (0) target = $region25
    $region24: #{critic_forward.1} parent=1 // pred_region
      %s136 = ssub.s32 128, 128
      %137 = vsyncadd [#allocation4], %s136
      %s139 = sshll.u32 [#allocation7], 4
      %s140 = int_to_ptr.vmem [resolvable:$true] %s139
      %142 = dma.vmem_to_hbm [thread:$0]  %s140, 128, %s3, [#allocation4]
    $region25: #{critic_forward.1} parent=1 // pred_fallthru
      _
    // Predicated region
    $region26: #{critic_forward.1} parent=1 // pred_check
      _
    $region27: #{critic_forward.1} parent=1 // pred_check_branch
      %144 = sbr.rel (0) target = $region29
    $region28: #{critic_forward.1} parent=1 // pred_region
      %145 = dma.done [#allocation4], 128
    $region29: #{critic_forward.1} parent=1 // pred_fallthru
      _
    %146 = vsyncpa [#allocation3], 1
    %147 = vsyncpa [#allocation6], 1
    %148 = vsyncpa [#allocation4], 1

</llo_original>
